<compile_context>
chip_gen: v5e
topology: v5e:2x2
jax: 0.10.0
libtpu: 0.0.40
codegen_flags: <defaults>
</compile_context>

<pallas_src>
import numpy as np
import jax
import jax.numpy as jnp
from jax.experimental import pallas as pl
from jax.experimental.pallas import tpu as pltpu


# ----------------------------------------------------------------------------
# Kernel 1: fused multi-layer LSTM over time (time-major), packed-seq masking.
#   PyTorch gate order i, f, g, o.  gates = [x_t | h_{t-1}] @ W + (b_ih + b_hh)
# ----------------------------------------------------------------------------
def make_lstm_kernel(num_layers, hidden):
    def kernel(len_ref, x_ref, *rest):
        y_ref = rest[-1]               # (T, B, H)
        wbs = rest[:-1]                # [w_0, b_0, w_1, b_1, ...]
        t_len = y_ref.shape[0]
        b = x_ref.shape[1]
        lens = len_ref[...]            # (B, 1) int32

        zeros = jnp.zeros((b, hidden), jnp.float32)
        init = tuple(zeros for _ in range(2 * num_layers))

        def step(t, carry):
            xin = x_ref[t]                                   # (B, E)
            new_carry = []
            for l in range(num_layers):
                h_prev = carry[2 * l]
                c_prev = carry[2 * l + 1]
                w = wbs[2 * l][...]                          # (in+H, 4H)
                bias = wbs[2 * l + 1][...]                   # (1, 4H)
                xh = jnp.concatenate([xin, h_prev], axis=1)  # (B, in+H)
                gates = jnp.dot(xh, w,
                                preferred_element_type=jnp.float32) + bias
                i_g = jax.nn.sigmoid(gates[:, 0 * hidden:1 * hidden])
                f_g = jax.nn.sigmoid(gates[:, 1 * hidden:2 * hidden])
                g_g = jnp.tanh(gates[:, 2 * hidden:3 * hidden])
                o_g = jax.nn.sigmoid(gates[:, 3 * hidden:4 * hidden])
                c_new = f_g * c_prev + i_g * g_g
                h_new = o_g * jnp.tanh(c_new)
                new_carry += [h_new, c_new]
                xin = h_new
            # pad_packed_sequence pads with zeros past each sequence length.
            valid = t < lens                                  # (B, 1) bool
            y_ref[t] = jnp.where(valid, xin, 0.0)
            return tuple(new_carry)

        jax.lax.fori_loop(0, t_len, step, init)

    return kernel


def lstm_forward(x_tbe, lengths_b, layer_ws, layer_bs, hidden):
    t_len, b, e = x_tbe.shape
    num_layers = len(layer_ws)
    lens2d = lengths_b.reshape(b, 1).astype(jnp.int32)

    in_arrays = [lens2d, x_tbe]
    in_specs = [pl.BlockSpec((b, 1), lambda i: (0, 0)),
                pl.BlockSpec((t_len, b, e), lambda i: (0, 0, 0))]
    for w, bias in zip(layer_ws, layer_bs):
        in_arrays += [w, bias]
        in_specs += [pl.BlockSpec(w.shape, lambda i: (0, 0)),
                     pl.BlockSpec(bias.shape, lambda i: (0, 0))]

    return pl.pallas_call(
        make_lstm_kernel(num_layers, hidden),
        out_shape=jax.ShapeDtypeStruct((t_len, b, hidden), jnp.float32),
        grid=(1,),
        in_specs=in_specs,
        out_specs=pl.BlockSpec((t_len, b, hidden), lambda i: (0, 0, 0)),
        compiler_params=pltpu.CompilerParams(
            dimension_semantics=("arbitrary",)),
    )(*in_arrays)


# ----------------------------------------------------------------------------
# Kernel 2: attention + softmax + pointer-generator output mix, per batch elem.
# ----------------------------------------------------------------------------
def attn_out_kernel(h_ref, eo_ref, eid_ref, ohv_ref,
                    wattn_ref, battn_ref, wlin_ref, blin_ref,
                    wpe_ref, bpe_ref, wpd_ref, bpd_ref, out_ref):
    hid = h_ref[0]                        # (T, H)
    eo = eo_ref[0]                        # (S, E)
    src_pad = eid_ref[0] == 0             # (1, S) bool
    ohv = ohv_ref[0]                      # (S, V)  == one_hot @ converter

    # attn(hiddens) @ encoder_output^T
    a = jnp.dot(hid, wattn_ref[...],
                preferred_element_type=jnp.float32) + battn_ref[...]   # (T, E)
    raw = jax.lax.dot_general(a, eo, (((1,), (1,)), ((), ())),
                              preferred_element_type=jnp.float32)      # (T, S)
    raw = jnp.where(src_pad, -jnp.inf, raw)                            # masked_fill

    # softmax over source positions
    m = jnp.max(raw, axis=1, keepdims=True)
    ew = jnp.exp(raw - m)
    attn_w = ew / jnp.sum(ew, axis=1, keepdims=True)                   # (T, S)

    context = jnp.dot(attn_w, eo, preferred_element_type=jnp.float32)  # (T, E)

    p_gen = jax.nn.sigmoid(
        jnp.dot(context, wpe_ref[...], preferred_element_type=jnp.float32)
        + bpe_ref[...]
        + jnp.dot(hid, wpd_ref[...], preferred_element_type=jnp.float32)
        + bpd_ref[...])                                                # (T, 1)

    out_reg = jnp.dot(hid, wlin_ref[...],
                      preferred_element_type=jnp.float32) + blin_ref[...]   # (T, V)
    raw_cl = jnp.clip(raw, -1000.0, 1000.0)        # clamp(-inf) -> -1000, as in torch
    out_ptr = jnp.dot(raw_cl, ohv, preferred_element_type=jnp.float32)      # (T, V)

    out_ref[0] = p_gen * out_reg + (1.0 - p_gen) * out_ptr


def attn_pointer_forward(hiddens_bth, enc_out, enc_ids_b1s, one_hot_vocab, p):
    b, t, h = hiddens_bth.shape
    s, e = enc_out.shape[1], enc_out.shape[2]
    v = p["w_lin"].shape[1]
    return pl.pallas_call(
        attn_out_kernel,
        out_shape=jax.ShapeDtypeStruct((b, t, v), jnp.float32),
        grid=(b,),
        in_specs=[
            pl.BlockSpec((1, t, h), lambda i: (i, 0, 0)),   # hiddens
            pl.BlockSpec((1, s, e), lambda i: (i, 0, 0)),   # encoder_output
            pl.BlockSpec((1, 1, s), lambda i: (i, 0, 0)),   # encoder_input ids
            pl.BlockSpec((1, s, v), lambda i: (i, 0, 0)),   # one_hot_vocab
            pl.BlockSpec((h, e), lambda i: (0, 0)),          # attn W^T
            pl.BlockSpec((1, e), lambda i: (0, 0)),
            pl.BlockSpec((h, v), lambda i: (0, 0)),          # linear W^T
            pl.BlockSpec((1, v), lambda i: (0, 0)),
            pl.BlockSpec((e, 1), lambda i: (0, 0)),          # pgen_encoder W^T
            pl.BlockSpec((1, 1), lambda i: (0, 0)),
            pl.BlockSpec((h, 1), lambda i: (0, 0)),          # pgen_decoder W^T
            pl.BlockSpec((1, 1), lambda i: (0, 0)),
        ],
        out_specs=pl.BlockSpec((1, t, v), lambda i: (i, 0, 0)),
        compiler_params=pltpu.CompilerParams(
            dimension_semantics=("parallel",)),
    )(hiddens_bth, enc_out, enc_ids_b1s, one_hot_vocab,
      p["w_attn"], p["b_attn"], p["w_lin"], p["b_lin"],
      p["w_pe"], p["b_pe"], p["w_pd"], p["b_pd"])


# ----------------------------------------------------------------------------
# Parameter construction (mirrors DecoderRNN.__init__ / init_weights)
# ----------------------------------------------------------------------------
def init_params(key, vocab_size, embed_size, hidden_size, num_layers,
                converter_rows=100):
    ks = jax.random.split(key, 8 + 3 * num_layers)
    p = {
        "emb": jax.random.uniform(ks[0], (vocab_size, embed_size),
                                  jnp.float32, -0.1, 0.1),
        "w_lin": jax.random.uniform(ks[1], (hidden_size, vocab_size),
                                    jnp.float32, -0.1, 0.1),   # stored transposed
        "b_lin": jnp.zeros((1, vocab_size), jnp.float32),
        "w_attn": jax.random.uniform(ks[2], (hidden_size, embed_size),
                                     jnp.float32, -0.1, 0.1),
        "b_attn": jnp.zeros((1, embed_size), jnp.float32),
        "w_pe": jax.random.uniform(ks[3], (embed_size, 1),
                                   jnp.float32, -0.1, 0.1),
        "b_pe": jnp.zeros((1, 1), jnp.float32),
        "w_pd": jax.random.uniform(ks[4], (hidden_size, 1),
                                   jnp.float32, -0.1, 0.1),
        "b_pd": jnp.zeros((1, 1), jnp.float32),
        "converter": jax.random.uniform(ks[5], (converter_rows, vocab_size),
                                        jnp.float32),
    }
    bound = 1.0 / np.sqrt(hidden_size)
    for l in range(num_layers):
        in_dim = embed_size if l == 0 else hidden_size
        # combined [W_ih^T ; W_hh^T] -> (in+H, 4H), combined bias b_ih + b_hh
        p[f"w_lstm_{l}"] = jax.random.uniform(
            ks[6 + 3 * l], (in_dim + hidden_size, 4 * hidden_size),
            jnp.float32, -bound, bound)
        b_ih = jax.random.uniform(ks[7 + 3 * l], (1, 4 * hidden_size),
                                  jnp.float32, -bound, bound)
        b_hh = jax.random.uniform(ks[8 + 3 * l], (1, 4 * hidden_size),
                                  jnp.float32, -bound, bound)
        p[f"b_lstm_{l}"] = b_ih + b_hh
    return p


# ----------------------------------------------------------------------------
# Forward pass (mirrors DecoderRNN.forward semantics)
# ----------------------------------------------------------------------------
def decoder_rnn_forward(params, features, captions, lengths,
                        encoder_input, encoder_output, num_layers, hidden_size):
    b, tc = captions.shape
    lengths_np = np.asarray(lengths)
    assert np.all(lengths_np[:-1] >= lengths_np[1:]), "lengths must be sorted desc"
    t_dec = int(lengths_np.max())

    # embedding lookup (row gather) + prepend image features, time-major input
    emb_cap = jnp.take(params["emb"], captions, axis=0)            # (B, Tc, E)
    x = jnp.concatenate([features[:, None, :], emb_cap], axis=1)   # (B, Tc+1, E)
    x = x[:, :t_dec, :].transpose(1, 0, 2)                         # (T, B, E)

    # fused multi-layer packed-sequence LSTM (Pallas kernel)
    lens = jnp.asarray(lengths_np, dtype=jnp.int32)
    layer_ws = [params[f"w_lstm_{l}"] for l in range(num_layers)]
    layer_bs = [params[f"b_lstm_{l}"] for l in range(num_layers)]
    hiddens_tbh = lstm_forward(x, lens, layer_ws, layer_bs, hidden_size)
    hiddens = hiddens_tbh.transpose(1, 0, 2)                       # (B, T, H)

    # scatter-to-one-hot @ converter  ==  converter row gather
    one_hot_vocab = jnp.take(params["converter"], encoder_input, axis=0)  # (B,S,V)
    enc_ids = encoder_input.reshape(b, 1, -1).astype(jnp.int32)           # (B,1,S)

    outputs = attn_pointer_forward(hiddens, encoder_output, enc_ids,
                                   one_hot_vocab, params)           # (B, T, V)

    # pack(outputs, lengths, batch_first=True)[0]: time-major valid rows only
    idx = []
    for t in range(t_dec):
        for bb in range(b):
            if lengths_np[bb] > t:
                idx.append(bb * t_dec + t)
    packed = outputs.reshape(b * t_dec, -1)[np.asarray(idx)]
    return packed


if __name__ == "__main__":
    # small, lane-friendly shapes consistent with the module
    VOCAB, EMBED, HID, LAYERS = 128, 128, 128, 2
    B, TC, S = 4, 8, 16
    lengths = [8, 6, 5, 3]            # sorted descending (pack requirement)

    key = jax.random.PRNGKey(0)
    kp, k1, k2, k3, k4 = jax.random.split(key, 5)
    params = init_params(kp, VOCAB, EMBED, HID, LAYERS)

    features = jax.random.uniform(k1, (B, EMBED), jnp.float32)
    captions = jax.random.randint(k2, (B, TC), 0, VOCAB, dtype=jnp.int32)
    encoder_output = jax.random.uniform(k3, (B, S, EMBED), jnp.float32)
    # encoder token ids in [1, 100), with zero padding at the tail of each row
    encoder_input = jax.random.randint(k4, (B, S), 1, 100, dtype=jnp.int32)
    src_lens = jnp.array([16, 12, 10, 7])
    encoder_input = jnp.where(jnp.arange(S)[None, :] < src_lens[:, None],
                              encoder_input, 0)

    outputs = decoder_rnn_forward(params, features, captions, lengths,
                                  encoder_input, encoder_output, LAYERS, HID)
    jax.block_until_ready(outputs)

    assert outputs.shape == (sum(lengths), VOCAB)
    assert bool(jnp.all(jnp.isfinite(outputs)))
    print("KERNEL_OK")
</pallas_src>

<mosaic_0001>
module attributes {stable_mosaic.version = 11 : i64} {
  func.func @kernel(%arg0: i32, %arg1: memref<4x1xi32, #tpu.memory_space<vmem>>, %arg2: memref<8x4x128xf32, #tpu.memory_space<vmem>>, %arg3: memref<256x512xf32, #tpu.memory_space<vmem>>, %arg4: memref<1x512xf32, #tpu.memory_space<vmem>>, %arg5: memref<256x512xf32, #tpu.memory_space<vmem>>, %arg6: memref<1x512xf32, #tpu.memory_space<vmem>>, %arg7: memref<8x4x128xf32, #tpu.memory_space<vmem>>) attributes {dimension_semantics = [#tpu.dimension_semantics<arbitrary>], iteration_bounds = array<i64: 1>, scalar_prefetch = 0 : i64, scratch_operands = 0 : i64, tpu.core_type = #tpu.core_type<tc>, window_params = [{pipeline_mode = #tpu.pipeline_mode<synchronous>, transform_indices = @transform_0, window_bounds = array<i64: 4, 1>}, {pipeline_mode = #tpu.pipeline_mode<synchronous>, transform_indices = @transform_1, window_bounds = array<i64: 8, 4, 128>}, {pipeline_mode = #tpu.pipeline_mode<synchronous>, transform_indices = @transform_2, window_bounds = array<i64: 256, 512>}, {pipeline_mode = #tpu.pipeline_mode<synchronous>, transform_indices = @transform_3, window_bounds = array<i64: 1, 512>}, {pipeline_mode = #tpu.pipeline_mode<synchronous>, transform_indices = @transform_4, window_bounds = array<i64: 256, 512>}, {pipeline_mode = #tpu.pipeline_mode<synchronous>, transform_indices = @transform_5, window_bounds = array<i64: 1, 512>}, {pipeline_mode = #tpu.pipeline_mode<synchronous>, transform_indices = @transform_6, window_bounds = array<i64: 8, 4, 128>}]} {
    %c0 = arith.constant 0 : index
    %c0_0 = arith.constant 0 : index
    %0 = vector.load %arg1[%c0, %c0_0] : memref<4x1xi32, #tpu.memory_space<vmem>>, vector<4x1xi32>
    %cst = arith.constant 0.000000e+00 : f32
    %1 = vector.broadcast %cst : f32 to vector<4x128xf32>
    %c0_i32 = arith.constant 0 : i32
    %c8_i32 = arith.constant 8 : i32
    %2 = arith.addi %c0_i32, %c8_i32 : i32
    %c1_i32 = arith.constant 1 : i32
    %3:4 = scf.for %arg8 = %c0_i32 to %2 step %c1_i32 iter_args(%arg9 = %1, %arg10 = %1, %arg11 = %1, %arg12 = %1) -> (vector<4x128xf32>, vector<4x128xf32>, vector<4x128xf32>, vector<4x128xf32>)  : i32 {
      %4 = arith.index_cast %arg8 : i32 to index
      %c0_2 = arith.constant 0 : index
      %c0_3 = arith.constant 0 : index
      %5 = vector.load %arg2[%4, %c0_2, %c0_3] : memref<8x4x128xf32, #tpu.memory_space<vmem>>, vector<1x4x128xf32>
      %6 = vector.shape_cast %5 : vector<1x4x128xf32> to vector<4x128xf32>
      %c0_4 = arith.constant 0 : index
      %c0_5 = arith.constant 0 : index
      %7 = vector.load %arg3[%c0_4, %c0_5] : memref<256x512xf32, #tpu.memory_space<vmem>>, vector<256x512xf32>
      %c0_6 = arith.constant 0 : index
      %c0_7 = arith.constant 0 : index
      %8 = vector.load %arg4[%c0_6, %c0_7] : memref<1x512xf32, #tpu.memory_space<vmem>>, vector<1x512xf32>
      %9 = tpu.concatenate %6, %arg9 in 1 : vector<4x128xf32>, vector<4x128xf32> -> vector<4x256xf32>
      %cst_8 = arith.constant dense<0.000000e+00> : vector<4x512xf32>
      %10 = tpu.matmul %9, %7, %cst_8 {dimension_numbers = #tpu.dot_dimension_numbers<[1], [0], [0], [1], [0, 0, 1, 1], [], []>} : vector<4x256xf32>, vector<256x512xf32>, vector<4x512xf32> -> vector<4x512xf32>
      %11 = vector.broadcast %8 : vector<1x512xf32> to vector<4x512xf32>
      %12 = arith.addf %10, %11 : vector<4x512xf32>
      %13 = vector.extract_strided_slice %12 {offsets = [0, 0], sizes = [4, 128], strides = [1, 1]} : vector<4x512xf32> to vector<4x128xf32>
      %14 = arith.negf %13 : vector<4x128xf32>
      %15 = math.exp %14 : vector<4x128xf32>
      %cst_9 = arith.constant 1.000000e+00 : f32
      %16 = vector.broadcast %cst_9 : f32 to vector<4x128xf32>
      %17 = arith.addf %16, %15 : vector<4x128xf32>
      %18 = arith.divf %16, %17 : vector<4x128xf32>
      %19 = vector.extract_strided_slice %12 {offsets = [0, 128], sizes = [4, 128], strides = [1, 1]} : vector<4x512xf32> to vector<4x128xf32>
      %20 = arith.negf %19 : vector<4x128xf32>
      %21 = math.exp %20 : vector<4x128xf32>
      %cst_10 = arith.constant 1.000000e+00 : f32
      %22 = vector.broadcast %cst_10 : f32 to vector<4x128xf32>
      %23 = arith.addf %22, %21 : vector<4x128xf32>
      %24 = arith.divf %22, %23 : vector<4x128xf32>
      %25 = vector.extract_strided_slice %12 {offsets = [0, 256], sizes = [4, 128], strides = [1, 1]} : vector<4x512xf32> to vector<4x128xf32>
      %26 = math.tanh %25 : vector<4x128xf32>
      %27 = vector.extract_strided_slice %12 {offsets = [0, 384], sizes = [4, 128], strides = [1, 1]} : vector<4x512xf32> to vector<4x128xf32>
      %28 = arith.negf %27 : vector<4x128xf32>
      %29 = math.exp %28 : vector<4x128xf32>
      %cst_11 = arith.constant 1.000000e+00 : f32
      %30 = vector.broadcast %cst_11 : f32 to vector<4x128xf32>
      %31 = arith.addf %30, %29 : vector<4x128xf32>
      %32 = arith.divf %30, %31 : vector<4x128xf32>
      %33 = arith.mulf %24, %arg10 : vector<4x128xf32>
      %34 = arith.mulf %18, %26 : vector<4x128xf32>
      %35 = arith.addf %33, %34 : vector<4x128xf32>
      %36 = math.tanh %35 : vector<4x128xf32>
      %37 = arith.mulf %32, %36 : vector<4x128xf32>
      %c0_12 = arith.constant 0 : index
      %c0_13 = arith.constant 0 : index
      %38 = vector.load %arg5[%c0_12, %c0_13] : memref<256x512xf32, #tpu.memory_space<vmem>>, vector<256x512xf32>
      %c0_14 = arith.constant 0 : index
      %c0_15 = arith.constant 0 : index
      %39 = vector.load %arg6[%c0_14, %c0_15] : memref<1x512xf32, #tpu.memory_space<vmem>>, vector<1x512xf32>
      %40 = tpu.concatenate %37, %arg11 in 1 : vector<4x128xf32>, vector<4x128xf32> -> vector<4x256xf32>
      %cst_16 = arith.constant dense<0.000000e+00> : vector<4x512xf32>
      %41 = tpu.matmul %40, %38, %cst_16 {dimension_numbers = #tpu.dot_dimension_numbers<[1], [0], [0], [1], [0, 0, 1, 1], [], []>} : vector<4x256xf32>, vector<256x512xf32>, vector<4x512xf32> -> vector<4x512xf32>
      %42 = vector.broadcast %39 : vector<1x512xf32> to vector<4x512xf32>
      %43 = arith.addf %41, %42 : vector<4x512xf32>
      %44 = vector.extract_strided_slice %43 {offsets = [0, 0], sizes = [4, 128], strides = [1, 1]} : vector<4x512xf32> to vector<4x128xf32>
      %45 = arith.negf %44 : vector<4x128xf32>
      %46 = math.exp %45 : vector<4x128xf32>
      %cst_17 = arith.constant 1.000000e+00 : f32
      %47 = vector.broadcast %cst_17 : f32 to vector<4x128xf32>
      %48 = arith.addf %47, %46 : vector<4x128xf32>
      %49 = arith.divf %47, %48 : vector<4x128xf32>
      %50 = vector.extract_strided_slice %43 {offsets = [0, 128], sizes = [4, 128], strides = [1, 1]} : vector<4x512xf32> to vector<4x128xf32>
      %51 = arith.negf %50 : vector<4x128xf32>
      %52 = math.exp %51 : vector<4x128xf32>
      %cst_18 = arith.constant 1.000000e+00 : f32
      %53 = vector.broadcast %cst_18 : f32 to vector<4x128xf32>
      %54 = arith.addf %53, %52 : vector<4x128xf32>
      %55 = arith.divf %53, %54 : vector<4x128xf32>
      %56 = vector.extract_strided_slice %43 {offsets = [0, 256], sizes = [4, 128], strides = [1, 1]} : vector<4x512xf32> to vector<4x128xf32>
      %57 = math.tanh %56 : vector<4x128xf32>
      %58 = vector.extract_strided_slice %43 {offsets = [0, 384], sizes = [4, 128], strides = [1, 1]} : vector<4x512xf32> to vector<4x128xf32>
      %59 = arith.negf %58 : vector<4x128xf32>
      %60 = math.exp %59 : vector<4x128xf32>
      %cst_19 = arith.constant 1.000000e+00 : f32
      %61 = vector.broadcast %cst_19 : f32 to vector<4x128xf32>
      %62 = arith.addf %61, %60 : vector<4x128xf32>
      %63 = arith.divf %61, %62 : vector<4x128xf32>
      %64 = arith.mulf %55, %arg12 : vector<4x128xf32>
      %65 = arith.mulf %49, %57 : vector<4x128xf32>
      %66 = arith.addf %64, %65 : vector<4x128xf32>
      %67 = math.tanh %66 : vector<4x128xf32>
      %68 = arith.mulf %63, %67 : vector<4x128xf32>
      %69 = vector.broadcast %arg8 : i32 to vector<4x1xi32>
      %70 = arith.cmpi slt, %69, %0 : vector<4x1xi32>
      %cst_20 = arith.constant 0.000000e+00 : f32
      %71 = vector.shape_cast %70 : vector<4x1xi1> to vector<4x1xi1>
      %72 = vector.broadcast %71 : vector<4x1xi1> to vector<4x128xi1>
      %73 = vector.broadcast %cst_20 : f32 to vector<4x128xf32>
      %74 = arith.select %72, %68, %73 : vector<4x128xi1>, vector<4x128xf32>
      %75 = arith.index_cast %arg8 : i32 to index
      %c0_21 = arith.constant 0 : index
      %c0_22 = arith.constant 0 : index
      %76 = vector.load %arg7[%75, %c0_21, %c0_22] : memref<8x4x128xf32, #tpu.memory_space<vmem>>, vector<1x4x128xf32>
      %77 = vector.shape_cast %76 : vector<1x4x128xf32> to vector<4x128xf32>
      %78 = vector.shape_cast %74 : vector<4x128xf32> to vector<1x4x128xf32>
      tpu.vector_store %arg7[%75, %c0_21, %c0_22], %78 {strides = array<i32>} : memref<8x4x128xf32, #tpu.memory_space<vmem>>, vector<1x4x128xf32>,
      scf.yield %37, %35, %68, %66 : vector<4x128xf32>, vector<4x128xf32>, vector<4x128xf32>, vector<4x128xf32>
    }
    %c8_i32_1 = arith.constant 8 : i32
    return
  }
  func.func @transform_0(%arg0: i32) -> (i32, i32) {
    %c0_i32 = arith.constant 0 : i32
    %c0_i32_0 = arith.constant 0 : i32
    %c0_i32_1 = arith.constant 0 : i32
    return %c0_i32, %c0_i32_0 : i32, i32
  }
  func.func @transform_1(%arg0: i32) -> (i32, i32, i32) {
    %c0_i32 = arith.constant 0 : i32
    %c0_i32_0 = arith.constant 0 : i32
    %c0_i32_1 = arith.constant 0 : i32
    %c0_i32_2 = arith.constant 0 : i32
    return %c0_i32, %c0_i32_0, %c0_i32_1 : i32, i32, i32
  }
  func.func @transform_2(%arg0: i32) -> (i32, i32) {
    %c0_i32 = arith.constant 0 : i32
    %c0_i32_0 = arith.constant 0 : i32
    %c0_i32_1 = arith.constant 0 : i32
    return %c0_i32, %c0_i32_0 : i32, i32
  }
  func.func @transform_3(%arg0: i32) -> (i32, i32) {
    %c0_i32 = arith.constant 0 : i32
    %c0_i32_0 = arith.constant 0 : i32
    %c0_i32_1 = arith.constant 0 : i32
    return %c0_i32, %c0_i32_0 : i32, i32
  }
  func.func @transform_4(%arg0: i32) -> (i32, i32) {
    %c0_i32 = arith.constant 0 : i32
    %c0_i32_0 = arith.constant 0 : i32
    %c0_i32_1 = arith.constant 0 : i32
    return %c0_i32, %c0_i32_0 : i32, i32
  }
  func.func @transform_5(%arg0: i32) -> (i32, i32) {
    %c0_i32 = arith.constant 0 : i32
    %c0_i32_0 = arith.constant 0 : i32
    %c0_i32_1 = arith.constant 0 : i32
    return %c0_i32, %c0_i32_0 : i32, i32
  }
  func.func @transform_6(%arg0: i32) -> (i32, i32, i32) {
    %c0_i32 = arith.constant 0 : i32
    %c0_i32_0 = arith.constant 0 : i32
    %c0_i32_1 = arith.constant 0 : i32
    %c0_i32_2 = arith.constant 0 : i32
    return %c0_i32, %c0_i32_0, %c0_i32_1 : i32, i32, i32
  }
}

</mosaic_0001>

<llo_original>
// kernel: tpu_custom_call.1
$region0: #{tpu_custom_call.1}
  #allocation0 [shape = 'u32[]', space=smem, size = 0x4, offset = 0x4, fixed_abs, tag = 'smem constant byte address 0x4 - core index']
  #allocation1 [shape = 'u32[72,128]{1,0:T(1,128)}', space=vmem, size = 0x9000, scoped, tag = 'internal scratch']
  %s0 = inlined_call_operand.vmem [shape: s32[4,1], index: 0, kind: input, shape index: {}]
  %s1 = inlined_call_operand.hbm [shape: f32[8,4,128], index: 1, kind: input, shape index: {}]
  %s2 = inlined_call_operand.hbm [shape: f32[256,512], index: 2, kind: input, shape index: {}]
  %s3 = inlined_call_operand.vmem [shape: f32[1,512], index: 3, kind: input, shape index: {}]
  %s4 = inlined_call_operand.hbm [shape: f32[256,512], index: 4, kind: input, shape index: {}]
  %s5 = inlined_call_operand.vmem [shape: f32[1,512], index: 5, kind: input, shape index: {}]
  %s6 = inlined_call_operand.hbm [shape: f32[8,4,128], index: 6, kind: output, shape index: {}]
  %s7 = sld [smem:[#allocation0]]
  $region53: #{tpu_custom_call.1} parent=0
    _
  %s9 = ssub.s32 1, %s7
  %s10 = scalar_select 0, %s9, %s7
  $region1: #{tpu_custom_call.1} parent=0
    #allocation2 [shape = 'u8[16384]{0}', space=vmem, size = 0x4000, scoped, tag = 'input window, operand 1, single buffered']
    #allocation3 [shape = 's32[1]{0}', space=sflag, size = 0x4, scoped, tag = 'scoped memory for tpu_custom_call.1']
    #allocation4 [shape = 's32[1]{0}', space=sflag, size = 0x4, scoped, tag = 'scoped memory for tpu_custom_call.1']
    #allocation5 [shape = 'u8[524288]{0}', space=vmem, size = 0x80000, scoped, tag = 'input window, operand 2, single buffered']
    #allocation6 [shape = 's32[1]{0}', space=sflag, size = 0x4, scoped, tag = 'scoped memory for tpu_custom_call.1']
    #allocation7 [shape = 'u8[524288]{0}', space=vmem, size = 0x80000, scoped, tag = 'input window, operand 4, single buffered']
    #allocation8 [shape = 'u8[16384]{0}', space=vmem, size = 0x4000, scoped, tag = 'output window, operand 0, single buffered']
    %11 = vsyncpa [#allocation3], 0
    %12 = vsyncpa [#allocation6], 0
    %13 = vsyncpa [#allocation4], 0
    // Predicated region
    $region2: #{tpu_custom_call.1} parent=1 // pred_check
      _
    $region3: #{tpu_custom_call.1} parent=1 // pred_check_branch
      %15 = sbr.rel (0) target = $region5
    $region4: #{tpu_custom_call.1} parent=1 // pred_region
      _
    $region5: #{tpu_custom_call.1} parent=1 // pred_fallthru
      _
    // Predicated region
    $region6: #{tpu_custom_call.1} parent=1 // pred_check
      _
    $region7: #{tpu_custom_call.1} parent=1 // pred_check_branch
      %17 = sbr.rel (0) target = $region9
    $region8: #{tpu_custom_call.1} parent=1 // pred_region
      %19 = vsyncadd [#allocation3], 0
      %s20 = sshll.u32 %s1, 4
      %s21 = int_to_ptr.hbm [resolvable:$true] %s20
      %s22 = sshll.u32 [#allocation2], 4
      %s23 = int_to_ptr.vmem [resolvable:$true] %s22
      %28 = dma.hbm_to_vmem [thread:$0]  %s21, 512, %s23, [#allocation3], 64, 64, 4
    $region9: #{tpu_custom_call.1} parent=1 // pred_fallthru
      _
    // Predicated region
    $region10: #{tpu_custom_call.1} parent=1 // pred_check
      _
    $region11: #{tpu_custom_call.1} parent=1 // pred_check_branch
      %30 = sbr.rel (0) target = $region13
    $region12: #{tpu_custom_call.1} parent=1 // pred_region
      %32 = vsyncadd [#allocation6], 0
      %s33 = sshll.u32 %s2, 4
      %s34 = int_to_ptr.hbm [resolvable:$true] %s33
      %s35 = sshll.u32 [#allocation5], 4
      %s36 = int_to_ptr.vmem [resolvable:$true] %s35
      %41 = dma.hbm_to_vmem [thread:$0]  %s34, 16384, %s36, [#allocation6], 512, 512, 32
    $region13: #{tpu_custom_call.1} parent=1 // pred_fallthru
      _
    // Predicated region
    $region14: #{tpu_custom_call.1} parent=1 // pred_check
      _
    $region15: #{tpu_custom_call.1} parent=1 // pred_check_branch
      %43 = sbr.rel (0) target = $region17
    $region16: #{tpu_custom_call.1} parent=1 // pred_region
      _
    $region17: #{tpu_custom_call.1} parent=1 // pred_fallthru
      _
    // Predicated region
    $region18: #{tpu_custom_call.1} parent=1 // pred_check
      _
    $region19: #{tpu_custom_call.1} parent=1 // pred_check_branch
      %45 = sbr.rel (0) target = $region21
    $region20: #{tpu_custom_call.1} parent=1 // pred_region
      %47 = vsyncadd [#allocation6], 0
      %s48 = sshll.u32 %s4, 4
      %s49 = int_to_ptr.hbm [resolvable:$true] %s48
      %s50 = sshll.u32 [#allocation7], 4
      %s51 = int_to_ptr.vmem [resolvable:$true] %s50
      %56 = dma.hbm_to_vmem [thread:$0]  %s49, 16384, %s51, [#allocation6], 512, 512, 32
    $region21: #{tpu_custom_call.1} parent=1 // pred_fallthru
      _
    // Predicated region
    $region22: #{tpu_custom_call.1} parent=1 // pred_check
      _
    $region23: #{tpu_custom_call.1} parent=1 // pred_check_branch
      %58 = sbr.rel (0) target = $region25
    $region24: #{tpu_custom_call.1} parent=1 // pred_region
      _
    $region25: #{tpu_custom_call.1} parent=1 // pred_fallthru
      _
    // Predicated region
    $region26: #{tpu_custom_call.1} parent=1 // pred_check
      _
    $region27: #{tpu_custom_call.1} parent=1 // pred_check_branch
      %60 = sbr.rel (0) target = $region29
    $region28: #{tpu_custom_call.1} parent=1 // pred_region
      %62 = dma.done [#allocation3], 512
    $region29: #{tpu_custom_call.1} parent=1 // pred_fallthru
      _
    // Predicated region
    $region30: #{tpu_custom_call.1} parent=1 // pred_check
      _
    $region31: #{tpu_custom_call.1} parent=1 // pred_check_branch
      %64 = sbr.rel (0) target = $region33
    $region32: #{tpu_custom_call.1} parent=1 // pred_region
      %66 = dma.done [#allocation6], 16384
    $region33: #{tpu_custom_call.1} parent=1 // pred_fallthru
      _
    // Predicated region
    $region34: #{tpu_custom_call.1} parent=1 // pred_check
      _
    $region35: #{tpu_custom_call.1} parent=1 // pred_check_branch
      %68 = sbr.rel (0) target = $region37
    $region36: #{tpu_custom_call.1} parent=1 // pred_region
      %70 = dma.done [#allocation6], 16384
    $region37: #{tpu_custom_call.1} parent=1 // pred_fallthru
      _
    %v71 = vld [vmem:[%s0] sm:$0xf]
    loop: start=0, step=1, limit=8
    $region38: #{tpu_custom_call.1} parent=1 // loop_pre_header
      _
    $region39: #{tpu_custom_call.1} parent=1 // loop_header
      %s73 = sphi 0, %s77
      %p74 = scmp.ge.s32.totalorder %s73, 8
      %v78 = vphi 0.0, %v445
      %v79 = vphi 0.0, %v443
      %v80 = vphi 0.0, %v806
      %v81 = vphi 0.0, %v804
    $region40: #{tpu_custom_call.1} parent=1 // loop_header_branch
      %76 = sbr.rel (%p74) target = $region44
    $region41: #{tpu_custom_call.1} parent=1 // loop_body
      %s82 = smul.u32 %s73, 4
      %s83 = scalar_lea.vmem [#allocation2], %s82
      %v84 = vld [vmem:[%s83] sm:$0xf]
      %v85 = vld [vmem:[#allocation5] sm:$0xff]
      %v86 = vld [vmem:[#allocation5 + $0x8] sm:$0xff]
      %v87 = vld [vmem:[#allocation5 + $0x10] sm:$0xff]
      %v88 = vld [vmem:[#allocation5 + $0x18] sm:$0xff]
      %v89 = vld [vmem:[#allocation5 + $0x20] sm:$0xff]
      %v90 = vld [vmem:[#allocation5 + $0x28] sm:$0xff]
      %v91 = vld [vmem:[#allocation5 + $0x30] sm:$0xff]
      %v92 = vld [vmem:[#allocation5 + $0x38] sm:$0xff]
      %v93 = vld [vmem:[#allocation5 + $0x40] sm:$0xff]
      %v94 = vld [vmem:[#allocation5 + $0x48] sm:$0xff]
      %v95 = vld [vmem:[#allocation5 + $0x50] sm:$0xff]
      %v96 = vld [vmem:[#allocation5 + $0x58] sm:$0xff]
      %v97 = vld [vmem:[#allocation5 + $0x60] sm:$0xff]
      %v98 = vld [vmem:[#allocation5 + $0x68] sm:$0xff]
      %v99 = vld [vmem:[#allocation5 + $0x70] sm:$0xff]
      %v100 = vld [vmem:[#allocation5 + $0x78] sm:$0xff]
      %v101 = vld [vmem:[#allocation5 + $0x80] sm:$0xff]
      %v102 = vld [vmem:[#allocation5 + $0x88] sm:$0xff]
      %v103 = vld [vmem:[#allocation5 + $0x90] sm:$0xff]
      %v104 = vld [vmem:[#allocation5 + $0x98] sm:$0xff]
      %v105 = vld [vmem:[#allocation5 + $0xa0] sm:$0xff]
      %v106 = vld [vmem:[#allocation5 + $0xa8] sm:$0xff]
      %v107 = vld [vmem:[#allocation5 + $0xb0] sm:$0xff]
      %v108 = vld [vmem:[#allocation5 + $0xb8] sm:$0xff]
      %v109 = vld [vmem:[#allocation5 + $0xc0] sm:$0xff]
      %v110 = vld [vmem:[#allocation5 + $0xc8] sm:$0xff]
      %v111 = vld [vmem:[#allocation5 + $0xd0] sm:$0xff]
      %v112 = vld [vmem:[#allocation5 + $0xd8] sm:$0xff]
      %v113 = vld [vmem:[#allocation5 + $0xe0] sm:$0xff]
      %v114 = vld [vmem:[#allocation5 + $0xe8] sm:$0xff]
      %v115 = vld [vmem:[#allocation5 + $0xf0] sm:$0xff]
      %v116 = vld [vmem:[#allocation5 + $0xf8] sm:$0xff]
      %v117 = vld [vmem:[#allocation5 + $0x100] sm:$0xff]
      %v118 = vld [vmem:[#allocation5 + $0x108] sm:$0xff]
      %v119 = vld [vmem:[#allocation5 + $0x110] sm:$0xff]
      %v120 = vld [vmem:[#allocation5 + $0x118] sm:$0xff]
      %v121 = vld [vmem:[#allocation5 + $0x120] sm:$0xff]
      %v122 = vld [vmem:[#allocation5 + $0x128] sm:$0xff]
      %v123 = vld [vmem:[#allocation5 + $0x130] sm:$0xff]
      %v124 = vld [vmem:[#allocation5 + $0x138] sm:$0xff]
      %v125 = vld [vmem:[#allocation5 + $0x140] sm:$0xff]
      %v126 = vld [vmem:[#allocation5 + $0x148] sm:$0xff]
      %v127 = vld [vmem:[#allocation5 + $0x150] sm:$0xff]
      %v128 = vld [vmem:[#allocation5 + $0x158] sm:$0xff]
      %v129 = vld [vmem:[#allocation5 + $0x160] sm:$0xff]
      %v130 = vld [vmem:[#allocation5 + $0x168] sm:$0xff]
      %v131 = vld [vmem:[#allocation5 + $0x170] sm:$0xff]
      %v132 = vld [vmem:[#allocation5 + $0x178] sm:$0xff]
      %v133 = vld [vmem:[#allocation5 + $0x180] sm:$0xff]
      %v134 = vld [vmem:[#allocation5 + $0x188] sm:$0xff]
      %v135 = vld [vmem:[#allocation5 + $0x190] sm:$0xff]
      %v136 = vld [vmem:[#allocation5 + $0x198] sm:$0xff]
      %v137 = vld [vmem:[#allocation5 + $0x1a0] sm:$0xff]
      %v138 = vld [vmem:[#allocation5 + $0x1a8] sm:$0xff]
      %v139 = vld [vmem:[#allocation5 + $0x1b0] sm:$0xff]
      %v140 = vld [vmem:[#allocation5 + $0x1b8] sm:$0xff]
      %v141 = vld [vmem:[#allocation5 + $0x1c0] sm:$0xff]
      %v142 = vld [vmem:[#allocation5 + $0x1c8] sm:$0xff]
      %v143 = vld [vmem:[#allocation5 + $0x1d0] sm:$0xff]
      %v144 = vld [vmem:[#allocation5 + $0x1d8] sm:$0xff]
      %v145 = vld [vmem:[#allocation5 + $0x1e0] sm:$0xff]
      %v146 = vld [vmem:[#allocation5 + $0x1e8] sm:$0xff]
      %v147 = vld [vmem:[#allocation5 + $0x1f0] sm:$0xff]
      %v148 = vld [vmem:[#allocation5 + $0x1f8] sm:$0xff]
      %v149 = vld [vmem:[#allocation5 + $0x200] sm:$0xff]
      %v150 = vld [vmem:[#allocation5 + $0x208] sm:$0xff]
      %v151 = vld [vmem:[#allocation5 + $0x210] sm:$0xff]
      %v152 = vld [vmem:[#allocation5 + $0x218] sm:$0xff]
      %v153 = vld [vmem:[#allocation5 + $0x220] sm:$0xff]
      %v154 = vld [vmem:[#allocation5 + $0x228] sm:$0xff]
      %v155 = vld [vmem:[#allocation5 + $0x230] sm:$0xff]
      %v156 = vld [vmem:[#allocation5 + $0x238] sm:$0xff]
      %v157 = vld [vmem:[#allocation5 + $0x240] sm:$0xff]
      %v158 = vld [vmem:[#allocation5 + $0x248] sm:$0xff]
      %v159 = vld [vmem:[#allocation5 + $0x250] sm:$0xff]
      %v160 = vld [vmem:[#allocation5 + $0x258] sm:$0xff]
      %v161 = vld [vmem:[#allocation5 + $0x260] sm:$0xff]
      %v162 = vld [vmem:[#allocation5 + $0x268] sm:$0xff]
      %v163 = vld [vmem:[#allocation5 + $0x270] sm:$0xff]
      %v164 = vld [vmem:[#allocation5 + $0x278] sm:$0xff]
      %v165 = vld [vmem:[#allocation5 + $0x280] sm:$0xff]
      %v166 = vld [vmem:[#allocation5 + $0x288] sm:$0xff]
      %v167 = vld [vmem:[#allocation5 + $0x290] sm:$0xff]
      %v168 = vld [vmem:[#allocation5 + $0x298] sm:$0xff]
      %v169 = vld [vmem:[#allocation5 + $0x2a0] sm:$0xff]
      %v170 = vld [vmem:[#allocation5 + $0x2a8] sm:$0xff]
      %v171 = vld [vmem:[#allocation5 + $0x2b0] sm:$0xff]
      %v172 = vld [vmem:[#allocation5 + $0x2b8] sm:$0xff]
      %v173 = vld [vmem:[#allocation5 + $0x2c0] sm:$0xff]
      %v174 = vld [vmem:[#allocation5 + $0x2c8] sm:$0xff]
      %v175 = vld [vmem:[#allocation5 + $0x2d0] sm:$0xff]
      %v176 = vld [vmem:[#allocation5 + $0x2d8] sm:$0xff]
      %v177 = vld [vmem:[#allocation5 + $0x2e0] sm:$0xff]
      %v178 = vld [vmem:[#allocation5 + $0x2e8] sm:$0xff]
      %v179 = vld [vmem:[#allocation5 + $0x2f0] sm:$0xff]
      %v180 = vld [vmem:[#allocation5 + $0x2f8] sm:$0xff]
      %v181 = vld [vmem:[#allocation5 + $0x300] sm:$0xff]
      %v182 = vld [vmem:[#allocation5 + $0x308] sm:$0xff]
      %v183 = vld [vmem:[#allocation5 + $0x310] sm:$0xff]
      %v184 = vld [vmem:[#allocation5 + $0x318] sm:$0xff]
      %v185 = vld [vmem:[#allocation5 + $0x320] sm:$0xff]
      %v186 = vld [vmem:[#allocation5 + $0x328] sm:$0xff]
      %v187 = vld [vmem:[#allocation5 + $0x330] sm:$0xff]
      %v188 = vld [vmem:[#allocation5 + $0x338] sm:$0xff]
      %v189 = vld [vmem:[#allocation5 + $0x340] sm:$0xff]
      %v190 = vld [vmem:[#allocation5 + $0x348] sm:$0xff]
      %v191 = vld [vmem:[#allocation5 + $0x350] sm:$0xff]
      %v192 = vld [vmem:[#allocation5 + $0x358] sm:$0xff]
      %v193 = vld [vmem:[#allocation5 + $0x360] sm:$0xff]
      %v194 = vld [vmem:[#allocation5 + $0x368] sm:$0xff]
      %v195 = vld [vmem:[#allocation5 + $0x370] sm:$0xff]
      %v196 = vld [vmem:[#allocation5 + $0x378] sm:$0xff]
      %v197 = vld [vmem:[#allocation5 + $0x380] sm:$0xff]
      %v198 = vld [vmem:[#allocation5 + $0x388] sm:$0xff]
      %v199 = vld [vmem:[#allocation5 + $0x390] sm:$0xff]
      %v200 = vld [vmem:[#allocation5 + $0x398] sm:$0xff]
      %v201 = vld [vmem:[#allocation5 + $0x3a0] sm:$0xff]
      %v202 = vld [vmem:[#allocation5 + $0x3a8] sm:$0xff]
      %v203 = vld [vmem:[#allocation5 + $0x3b0] sm:$0xff]
      %v204 = vld [vmem:[#allocation5 + $0x3b8] sm:$0xff]
      %v205 = vld [vmem:[#allocation5 + $0x3c0] sm:$0xff]
      %v206 = vld [vmem:[#allocation5 + $0x3c8] sm:$0xff]
      %v207 = vld [vmem:[#allocation5 + $0x3d0] sm:$0xff]
      %v208 = vld [vmem:[#allocation5 + $0x3d8] sm:$0xff]
      %v209 = vld [vmem:[#allocation5 + $0x3e0] sm:$0xff]
      %v210 = vld [vmem:[#allocation5 + $0x3e8] sm:$0xff]
      %v211 = vld [vmem:[#allocation5 + $0x3f0] sm:$0xff]
      %v212 = vld [vmem:[#allocation5 + $0x3f8] sm:$0xff]
      %v213 = vld [vmem:[%s3] sm:$0xf]
      %v215 = vperm.slane %v213, 0
      %v216 = vperm.slane %v213, 1
      %v217 = vperm.slane %v213, 2
      %v218 = vperm.slane %v213, 3
      %223 = vmatpush.msra.mxu0 %v145
      %224 = vmatpush.msra.mxu0 %v141
      %225 = vmatpush.msra.mxu0 %v137
      %226 = vmatpush.msra.mxu0 %v133
      %227 = vmatpush.msra.mxu0 %v129
      %228 = vmatpush.msra.mxu0 %v125
      %229 = vmatpush.msra.mxu0 %v121
      %230 = vmatpush.msra.mxu0 %v117
      %231 = vmatpush.msra.mxu0 %v113
      %232 = vmatpush.msra.mxu0 %v109
      %233 = vmatpush.msra.mxu0 %v105
      %234 = vmatpush.msra.mxu0 %v101
      %235 = vmatpush.msra.mxu0 %v97
      %236 = vmatpush.msra.mxu0 %v93
      %237 = vmatpush.msra.mxu0 %v89
      %238 = vmatpush.msra.mxu0 %v85
      %239 = vmatmul.f32.gmra.mxu0 %v84
      %v240 = vpop.f32.mrf.mxu0
      %v241 = vadd.f32 %v215, %v240
      %242 = vdwg.mxu0
      %243 = vmatpush.msra.mxu0 %v209
      %244 = vmatpush.msra.mxu0 %v205
      %245 = vmatpush.msra.mxu0 %v201
      %246 = vmatpush.msra.mxu0 %v197
      %247 = vmatpush.msra.mxu0 %v193
      %248 = vmatpush.msra.mxu0 %v189
      %249 = vmatpush.msra.mxu0 %v185
      %250 = vmatpush.msra.mxu0 %v181
      %251 = vmatpush.msra.mxu0 %v177
      %252 = vmatpush.msra.mxu0 %v173
      %253 = vmatpush.msra.mxu0 %v169
      %254 = vmatpush.msra.mxu0 %v165
      %255 = vmatpush.msra.mxu0 %v161
      %256 = vmatpush.msra.mxu0 %v157
      %257 = vmatpush.msra.mxu0 %v153
      %258 = vmatpush.msra.mxu0 %v149
      %259 = vmatmul.f32.gmra.mxu0 %v78
      %v260 = vpop.f32.mrf.mxu0
      %v261 = vadd.f32 %v241, %v260
      %262 = vdwg.mxu0
      %263 = vmatpush.msra.mxu0 %v146
      %264 = vmatpush.msra.mxu0 %v142
      %265 = vmatpush.msra.mxu0 %v138
      %266 = vmatpush.msra.mxu0 %v134
      %267 = vmatpush.msra.mxu0 %v130
      %268 = vmatpush.msra.mxu0 %v126
      %269 = vmatpush.msra.mxu0 %v122
      %270 = vmatpush.msra.mxu0 %v118
      %271 = vmatpush.msra.mxu0 %v114
      %272 = vmatpush.msra.mxu0 %v110
      %273 = vmatpush.msra.mxu0 %v106
      %274 = vmatpush.msra.mxu0 %v102
      %275 = vmatpush.msra.mxu0 %v98
      %276 = vmatpush.msra.mxu0 %v94
      %277 = vmatpush.msra.mxu0 %v90
      %278 = vmatpush.msra.mxu0 %v86
      %279 = vmatmul.f32.gmra.mxu0 %v84
      %v280 = vpop.f32.mrf.mxu0
      %v281 = vadd.f32 %v216, %v280
      %282 = vdwg.mxu0
      %283 = vmatpush.msra.mxu0 %v210
      %284 = vmatpush.msra.mxu0 %v206
      %285 = vmatpush.msra.mxu0 %v202
      %286 = vmatpush.msra.mxu0 %v198
      %287 = vmatpush.msra.mxu0 %v194
      %288 = vmatpush.msra.mxu0 %v190
      %289 = vmatpush.msra.mxu0 %v186
      %290 = vmatpush.msra.mxu0 %v182
      %291 = vmatpush.msra.mxu0 %v178
      %292 = vmatpush.msra.mxu0 %v174
      %293 = vmatpush.msra.mxu0 %v170
      %294 = vmatpush.msra.mxu0 %v166
      %295 = vmatpush.msra.mxu0 %v162
      %296 = vmatpush.msra.mxu0 %v158
      %297 = vmatpush.msra.mxu0 %v154
      %298 = vmatpush.msra.mxu0 %v150
      %299 = vmatmul.f32.gmra.mxu0 %v78
      %v300 = vpop.f32.mrf.mxu0
      %v301 = vadd.f32 %v281, %v300
      %302 = vdwg.mxu0
      %303 = vmatpush.msra.mxu0 %v147
      %304 = vmatpush.msra.mxu0 %v143
      %305 = vmatpush.msra.mxu0 %v139
      %306 = vmatpush.msra.mxu0 %v135
      %307 = vmatpush.msra.mxu0 %v131
      %308 = vmatpush.msra.mxu0 %v127
      %309 = vmatpush.msra.mxu0 %v123
      %310 = vmatpush.msra.mxu0 %v119
      %311 = vmatpush.msra.mxu0 %v115
      %312 = vmatpush.msra.mxu0 %v111
      %313 = vmatpush.msra.mxu0 %v107
      %314 = vmatpush.msra.mxu0 %v103
      %315 = vmatpush.msra.mxu0 %v99
      %316 = vmatpush.msra.mxu0 %v95
      %317 = vmatpush.msra.mxu0 %v91
      %318 = vmatpush.msra.mxu0 %v87
      %319 = vmatmul.f32.gmra.mxu0 %v84
      %v320 = vpop.f32.mrf.mxu0
      %v321 = vadd.f32 %v217, %v320
      %322 = vdwg.mxu0
      %323 = vmatpush.msra.mxu0 %v211
      %324 = vmatpush.msra.mxu0 %v207
      %325 = vmatpush.msra.mxu0 %v203
      %326 = vmatpush.msra.mxu0 %v199
      %327 = vmatpush.msra.mxu0 %v195
      %328 = vmatpush.msra.mxu0 %v191
      %329 = vmatpush.msra.mxu0 %v187
      %330 = vmatpush.msra.mxu0 %v183
      %331 = vmatpush.msra.mxu0 %v179
      %332 = vmatpush.msra.mxu0 %v175
      %333 = vmatpush.msra.mxu0 %v171
      %334 = vmatpush.msra.mxu0 %v167
      %335 = vmatpush.msra.mxu0 %v163
      %336 = vmatpush.msra.mxu0 %v159
      %337 = vmatpush.msra.mxu0 %v155
      %338 = vmatpush.msra.mxu0 %v151
      %339 = vmatmul.f32.gmra.mxu0 %v78
      %v340 = vpop.f32.mrf.mxu0
      %v341 = vadd.f32 %v321, %v340
      %342 = vdwg.mxu0
      %343 = vmatpush.msra.mxu0 %v148
      %344 = vmatpush.msra.mxu0 %v144
      %345 = vmatpush.msra.mxu0 %v140
      %346 = vmatpush.msra.mxu0 %v136
      %347 = vmatpush.msra.mxu0 %v132
      %348 = vmatpush.msra.mxu0 %v128
      %349 = vmatpush.msra.mxu0 %v124
      %350 = vmatpush.msra.mxu0 %v120
      %351 = vmatpush.msra.mxu0 %v116
      %352 = vmatpush.msra.mxu0 %v112
      %353 = vmatpush.msra.mxu0 %v108
      %354 = vmatpush.msra.mxu0 %v104
      %355 = vmatpush.msra.mxu0 %v100
      %356 = vmatpush.msra.mxu0 %v96
      %357 = vmatpush.msra.mxu0 %v92
      %358 = vmatpush.msra.mxu0 %v88
      %359 = vmatmul.f32.gmra.mxu0 %v84
      %v360 = vpop.f32.mrf.mxu0
      %v361 = vadd.f32 %v218, %v360
      %362 = vdwg.mxu0
      %363 = vmatpush.msra.mxu0 %v212
      %364 = vmatpush.msra.mxu0 %v208
      %365 = vmatpush.msra.mxu0 %v204
      %366 = vmatpush.msra.mxu0 %v200
      %367 = vmatpush.msra.mxu0 %v196
      %368 = vmatpush.msra.mxu0 %v192
      %369 = vmatpush.msra.mxu0 %v188
      %370 = vmatpush.msra.mxu0 %v184
      %371 = vmatpush.msra.mxu0 %v180
      %372 = vmatpush.msra.mxu0 %v176
      %373 = vmatpush.msra.mxu0 %v172
      %374 = vmatpush.msra.mxu0 %v168
      %375 = vmatpush.msra.mxu0 %v164
      %376 = vmatpush.msra.mxu0 %v160
      %377 = vmatpush.msra.mxu0 %v156
      %378 = vmatpush.msra.mxu0 %v152
      %379 = vmatmul.f32.gmra.mxu0 %v78
      %v380 = vpop.f32.mrf.mxu0
      %v381 = vadd.f32 %v361, %v380
      %382 = vdwg.mxu0
      %v383 = vxor.u32 %v261, 2147483648
      %v384 = vmul.f32 %v383, 1.442695
      %v385 = vpow.pop %v384
      %v386 = vadd.f32 %v385, 1.0
      %v387 = vrcp.pop %v386
      %v388 = vmul.f32 %v386, %v387
      %v389 = vsub.f32 1.0, %v388
      %v390 = vmul.f32 %v387, %v389
      %v391 = vadd.f32 %v387, %v390
      %vm392 = vweird.f32 %v386
      %vm393 = vweird.f32 %v387
      %vm394 = vmor %vm392, %vm393
      %v395 = vsel %vm394, %v387, %v391
      %v396 = vand.u32 2147483647, %v386
      %vm397 = vcmp.eq.f32.partialorder %v396, 8.507059e+37
      %v398 = vand.u32 %v386, 2147483648
      %v399 = vor.u32 1.1754944e-38, %v398
      %v400 = vsel %vm397, %v399, %v395
      %v401 = vmul.f32 1.0, %v400
      %v402 = vxor.u32 %v301, 2147483648
      %v403 = vmul.f32 %v402, 1.442695
      %v404 = vpow.pop %v403
      %v405 = vadd.f32 %v404, 1.0
      %v406 = vrcp.pop %v405
      %v407 = vmul.f32 %v405, %v406
      %v408 = vsub.f32 1.0, %v407
      %v409 = vmul.f32 %v406, %v408
      %v410 = vadd.f32 %v406, %v409
      %vm411 = vweird.f32 %v405
      %vm412 = vweird.f32 %v406
      %vm413 = vmor %vm411, %vm412
      %v414 = vsel %vm413, %v406, %v410
      %v415 = vand.u32 2147483647, %v405
      %vm416 = vcmp.eq.f32.partialorder %v415, 8.507059e+37
      %v417 = vand.u32 %v405, 2147483648
      %v418 = vor.u32 1.1754944e-38, %v417
      %v419 = vsel %vm416, %v418, %v414
      %v420 = vmul.f32 1.0, %v419
      %v421 = vtanh.pop %v341
      %v422 = vxor.u32 %v381, 2147483648
      %v423 = vmul.f32 %v422, 1.442695
      %v424 = vpow.pop %v423
      %v425 = vadd.f32 %v424, 1.0
      %v426 = vrcp.pop %v425
      %v427 = vmul.f32 %v425, %v426
      %v428 = vsub.f32 1.0, %v427
      %v429 = vmul.f32 %v426, %v428
      %v430 = vadd.f32 %v426, %v429
      %vm431 = vweird.f32 %v425
      %vm432 = vweird.f32 %v426
      %vm433 = vmor %vm431, %vm432
      %v434 = vsel %vm433, %v426, %v430
      %v435 = vand.u32 2147483647, %v425
      %vm436 = vcmp.eq.f32.partialorder %v435, 8.507059e+37
      %v437 = vand.u32 %v425, 2147483648
      %v438 = vor.u32 1.1754944e-38, %v437
      %v439 = vsel %vm436, %v438, %v434
      %v440 = vmul.f32 1.0, %v439
      %v441 = vmul.f32 %v420, %v79
      %v442 = vmul.f32 %v401, %v421
      %v443 = vadd.f32 %v441, %v442
      %v444 = vtanh.pop %v443
      %v445 = vmul.f32 %v440, %v444
      %v446 = vld [vmem:[#allocation7] sm:$0xff]
      %v447 = vld [vmem:[#allocation7 + $0x8] sm:$0xff]
      %v448 = vld [vmem:[#allocation7 + $0x10] sm:$0xff]
      %v449 = vld [vmem:[#allocation7 + $0x18] sm:$0xff]
      %v450 = vld [vmem:[#allocation7 + $0x20] sm:$0xff]
      %v451 = vld [vmem:[#allocation7 + $0x28] sm:$0xff]
      %v452 = vld [vmem:[#allocation7 + $0x30] sm:$0xff]
      %v453 = vld [vmem:[#allocation7 + $0x38] sm:$0xff]
      %v454 = vld [vmem:[#allocation7 + $0x40] sm:$0xff]
      %v455 = vld [vmem:[#allocation7 + $0x48] sm:$0xff]
      %v456 = vld [vmem:[#allocation7 + $0x50] sm:$0xff]
      %v457 = vld [vmem:[#allocation7 + $0x58] sm:$0xff]
      %v458 = vld [vmem:[#allocation7 + $0x60] sm:$0xff]
      %v459 = vld [vmem:[#allocation7 + $0x68] sm:$0xff]
      %v460 = vld [vmem:[#allocation7 + $0x70] sm:$0xff]
      %v461 = vld [vmem:[#allocation7 + $0x78] sm:$0xff]
      %v462 = vld [vmem:[#allocation7 + $0x80] sm:$0xff]
      %v463 = vld [vmem:[#allocation7 + $0x88] sm:$0xff]
      %v464 = vld [vmem:[#allocation7 + $0x90] sm:$0xff]
      %v465 = vld [vmem:[#allocation7 + $0x98] sm:$0xff]
      %v466 = vld [vmem:[#allocation7 + $0xa0] sm:$0xff]
      %v467 = vld [vmem:[#allocation7 + $0xa8] sm:$0xff]
      %v468 = vld [vmem:[#allocation7 + $0xb0] sm:$0xff]
      %v469 = vld [vmem:[#allocation7 + $0xb8] sm:$0xff]
      %v470 = vld [vmem:[#allocation7 + $0xc0] sm:$0xff]
      %v471 = vld [vmem:[#allocation7 + $0xc8] sm:$0xff]
      %v472 = vld [vmem:[#allocation7 + $0xd0] sm:$0xff]
      %v473 = vld [vmem:[#allocation7 + $0xd8] sm:$0xff]
      %v474 = vld [vmem:[#allocation7 + $0xe0] sm:$0xff]
      %v475 = vld [vmem:[#allocation7 + $0xe8] sm:$0xff]
      %v476 = vld [vmem:[#allocation7 + $0xf0] sm:$0xff]
      %v477 = vld [vmem:[#allocation7 + $0xf8] sm:$0xff]
      %v478 = vld [vmem:[#allocation7 + $0x100] sm:$0xff]
      %v479 = vld [vmem:[#allocation7 + $0x108] sm:$0xff]
      %v480 = vld [vmem:[#allocation7 + $0x110] sm:$0xff]
      %v481 = vld [vmem:[#allocation7 + $0x118] sm:$0xff]
      %v482 = vld [vmem:[#allocation7 + $0x120] sm:$0xff]
      %v483 = vld [vmem:[#allocation7 + $0x128] sm:$0xff]
      %v484 = vld [vmem:[#allocation7 + $0x130] sm:$0xff]
      %v485 = vld [vmem:[#allocation7 + $0x138] sm:$0xff]
      %v486 = vld [vmem:[#allocation7 + $0x140] sm:$0xff]
      %v487 = vld [vmem:[#allocation7 + $0x148] sm:$0xff]
      %v488 = vld [vmem:[#allocation7 + $0x150] sm:$0xff]
      %v489 = vld [vmem:[#allocation7 + $0x158] sm:$0xff]
      %v490 = vld [vmem:[#allocation7 + $0x160] sm:$0xff]
      %v491 = vld [vmem:[#allocation7 + $0x168] sm:$0xff]
      %v492 = vld [vmem:[#allocation7 + $0x170] sm:$0xff]
      %v493 = vld [vmem:[#allocation7 + $0x178] sm:$0xff]
      %v494 = vld [vmem:[#allocation7 + $0x180] sm:$0xff]
      %v495 = vld [vmem:[#allocation7 + $0x188] sm:$0xff]
      %v496 = vld [vmem:[#allocation7 + $0x190] sm:$0xff]
      %v497 = vld [vmem:[#allocation7 + $0x198] sm:$0xff]
      %v498 = vld [vmem:[#allocation7 + $0x1a0] sm:$0xff]
      %v499 = vld [vmem:[#allocation7 + $0x1a8] sm:$0xff]
      %v500 = vld [vmem:[#allocation7 + $0x1b0] sm:$0xff]
      %v501 = vld [vmem:[#allocation7 + $0x1b8] sm:$0xff]
      %v502 = vld [vmem:[#allocation7 + $0x1c0] sm:$0xff]
      %v503 = vld [vmem:[#allocation7 + $0x1c8] sm:$0xff]
      %v504 = vld [vmem:[#allocation7 + $0x1d0] sm:$0xff]
      %v505 = vld [vmem:[#allocation7 + $0x1d8] sm:$0xff]
      %v506 = vld [vmem:[#allocation7 + $0x1e0] sm:$0xff]
      %v507 = vld [vmem:[#allocation7 + $0x1e8] sm:$0xff]
      %v508 = vld [vmem:[#allocation7 + $0x1f0] sm:$0xff]
      %v509 = vld [vmem:[#allocation7 + $0x1f8] sm:$0xff]
      %v510 = vld [vmem:[#allocation7 + $0x200] sm:$0xff]
      %v511 = vld [vmem:[#allocation7 + $0x208] sm:$0xff]
      %v512 = vld [vmem:[#allocation7 + $0x210] sm:$0xff]
      %v513 = vld [vmem:[#allocation7 + $0x218] sm:$0xff]
      %v514 = vld [vmem:[#allocation7 + $0x220] sm:$0xff]
      %v515 = vld [vmem:[#allocation7 + $0x228] sm:$0xff]
      %v516 = vld [vmem:[#allocation7 + $0x230] sm:$0xff]
      %v517 = vld [vmem:[#allocation7 + $0x238] sm:$0xff]
      %v518 = vld [vmem:[#allocation7 + $0x240] sm:$0xff]
      %v519 = vld [vmem:[#allocation7 + $0x248] sm:$0xff]
      %v520 = vld [vmem:[#allocation7 + $0x250] sm:$0xff]
      %v521 = vld [vmem:[#allocation7 + $0x258] sm:$0xff]
      %v522 = vld [vmem:[#allocation7 + $0x260] sm:$0xff]
      %v523 = vld [vmem:[#allocation7 + $0x268] sm:$0xff]
      %v524 = vld [vmem:[#allocation7 + $0x270] sm:$0xff]
      %v525 = vld [vmem:[#allocation7 + $0x278] sm:$0xff]
      %v526 = vld [vmem:[#allocation7 + $0x280] sm:$0xff]
      %v527 = vld [vmem:[#allocation7 + $0x288] sm:$0xff]
      %v528 = vld [vmem:[#allocation7 + $0x290] sm:$0xff]
      %v529 = vld [vmem:[#allocation7 + $0x298] sm:$0xff]
      %v530 = vld [vmem:[#allocation7 + $0x2a0] sm:$0xff]
      %v531 = vld [vmem:[#allocation7 + $0x2a8] sm:$0xff]
      %v532 = vld [vmem:[#allocation7 + $0x2b0] sm:$0xff]
      %v533 = vld [vmem:[#allocation7 + $0x2b8] sm:$0xff]
      %v534 = vld [vmem:[#allocation7 + $0x2c0] sm:$0xff]
      %v535 = vld [vmem:[#allocation7 + $0x2c8] sm:$0xff]
      %v536 = vld [vmem:[#allocation7 + $0x2d0] sm:$0xff]
      %v537 = vld [vmem:[#allocation7 + $0x2d8] sm:$0xff]
      %v538 = vld [vmem:[#allocation7 + $0x2e0] sm:$0xff]
      %v539 = vld [vmem:[#allocation7 + $0x2e8] sm:$0xff]
      %v540 = vld [vmem:[#allocation7 + $0x2f0] sm:$0xff]
      %v541 = vld [vmem:[#allocation7 + $0x2f8] sm:$0xff]
      %v542 = vld [vmem:[#allocation7 + $0x300] sm:$0xff]
      %v543 = vld [vmem:[#allocation7 + $0x308] sm:$0xff]
      %v544 = vld [vmem:[#allocation7 + $0x310] sm:$0xff]
      %v545 = vld [vmem:[#allocation7 + $0x318] sm:$0xff]
      %v546 = vld [vmem:[#allocation7 + $0x320] sm:$0xff]
      %v547 = vld [vmem:[#allocation7 + $0x328] sm:$0xff]
      %v548 = vld [vmem:[#allocation7 + $0x330] sm:$0xff]
      %v549 = vld [vmem:[#allocation7 + $0x338] sm:$0xff]
      %v550 = vld [vmem:[#allocation7 + $0x340] sm:$0xff]
      %v551 = vld [vmem:[#allocation7 + $0x348] sm:$0xff]
      %v552 = vld [vmem:[#allocation7 + $0x350] sm:$0xff]
      %v553 = vld [vmem:[#allocation7 + $0x358] sm:$0xff]
      %v554 = vld [vmem:[#allocation7 + $0x360] sm:$0xff]
      %v555 = vld [vmem:[#allocation7 + $0x368] sm:$0xff]
      %v556 = vld [vmem:[#allocation7 + $0x370] sm:$0xff]
      %v557 = vld [vmem:[#allocation7 + $0x378] sm:$0xff]
      %v558 = vld [vmem:[#allocation7 + $0x380] sm:$0xff]
      %v559 = vld [vmem:[#allocation7 + $0x388] sm:$0xff]
      %v560 = vld [vmem:[#allocation7 + $0x390] sm:$0xff]
      %v561 = vld [vmem:[#allocation7 + $0x398] sm:$0xff]
      %v562 = vld [vmem:[#allocation7 + $0x3a0] sm:$0xff]
      %v563 = vld [vmem:[#allocation7 + $0x3a8] sm:$0xff]
      %v564 = vld [vmem:[#allocation7 + $0x3b0] sm:$0xff]
      %v565 = vld [vmem:[#allocation7 + $0x3b8] sm:$0xff]
      %v566 = vld [vmem:[#allocation7 + $0x3c0] sm:$0xff]
      %v567 = vld [vmem:[#allocation7 + $0x3c8] sm:$0xff]
      %v568 = vld [vmem:[#allocation7 + $0x3d0] sm:$0xff]
      %v569 = vld [vmem:[#allocation7 + $0x3d8] sm:$0xff]
      %v570 = vld [vmem:[#allocation7 + $0x3e0] sm:$0xff]
      %v571 = vld [vmem:[#allocation7 + $0x3e8] sm:$0xff]
      %v572 = vld [vmem:[#allocation7 + $0x3f0] sm:$0xff]
      %v573 = vld [vmem:[#allocation7 + $0x3f8] sm:$0xff]
      %v574 = vld [vmem:[%s5] sm:$0xf]
      %v576 = vperm.slane %v574, 0
      %v577 = vperm.slane %v574, 1
      %v578 = vperm.slane %v574, 2
      %v579 = vperm.slane %v574, 3
      %584 = vmatpush.msra.mxu0 %v506
      %585 = vmatpush.msra.mxu0 %v502
      %586 = vmatpush.msra.mxu0 %v498
      %587 = vmatpush.msra.mxu0 %v494
      %588 = vmatpush.msra.mxu0 %v490
      %589 = vmatpush.msra.mxu0 %v486
      %590 = vmatpush.msra.mxu0 %v482
      %591 = vmatpush.msra.mxu0 %v478
      %592 = vmatpush.msra.mxu0 %v474
      %593 = vmatpush.msra.mxu0 %v470
      %594 = vmatpush.msra.mxu0 %v466
      %595 = vmatpush.msra.mxu0 %v462
      %596 = vmatpush.msra.mxu0 %v458
      %597 = vmatpush.msra.mxu0 %v454
      %598 = vmatpush.msra.mxu0 %v450
      %599 = vmatpush.msra.mxu0 %v446
      %600 = vmatmul.f32.gmra.mxu0 %v445
      %v601 = vpop.f32.mrf.mxu0
      %v602 = vadd.f32 %v576, %v601
      %603 = vdwg.mxu0
      %604 = vmatpush.msra.mxu0 %v570
      %605 = vmatpush.msra.mxu0 %v566
      %606 = vmatpush.msra.mxu0 %v562
      %607 = vmatpush.msra.mxu0 %v558
      %608 = vmatpush.msra.mxu0 %v554
      %609 = vmatpush.msra.mxu0 %v550
      %610 = vmatpush.msra.mxu0 %v546
      %611 = vmatpush.msra.mxu0 %v542
      %612 = vmatpush.msra.mxu0 %v538
      %613 = vmatpush.msra.mxu0 %v534
      %614 = vmatpush.msra.mxu0 %v530
      %615 = vmatpush.msra.mxu0 %v526
      %616 = vmatpush.msra.mxu0 %v522
      %617 = vmatpush.msra.mxu0 %v518
      %618 = vmatpush.msra.mxu0 %v514
      %619 = vmatpush.msra.mxu0 %v510
      %620 = vmatmul.f32.gmra.mxu0 %v80
      %v621 = vpop.f32.mrf.mxu0
      %v622 = vadd.f32 %v602, %v621
      %623 = vdwg.mxu0
      %624 = vmatpush.msra.mxu0 %v507
      %625 = vmatpush.msra.mxu0 %v503
      %626 = vmatpush.msra.mxu0 %v499
      %627 = vmatpush.msra.mxu0 %v495
      %628 = vmatpush.msra.mxu0 %v491
      %629 = vmatpush.msra.mxu0 %v487
      %630 = vmatpush.msra.mxu0 %v483
      %631 = vmatpush.msra.mxu0 %v479
      %632 = vmatpush.msra.mxu0 %v475
      %633 = vmatpush.msra.mxu0 %v471
      %634 = vmatpush.msra.mxu0 %v467
      %635 = vmatpush.msra.mxu0 %v463
      %636 = vmatpush.msra.mxu0 %v459
      %637 = vmatpush.msra.mxu0 %v455
      %638 = vmatpush.msra.mxu0 %v451
      %639 = vmatpush.msra.mxu0 %v447
      %640 = vmatmul.f32.gmra.mxu0 %v445
      %v641 = vpop.f32.mrf.mxu0
      %v642 = vadd.f32 %v577, %v641
      %643 = vdwg.mxu0
      %644 = vmatpush.msra.mxu0 %v571
      %645 = vmatpush.msra.mxu0 %v567
      %646 = vmatpush.msra.mxu0 %v563
      %647 = vmatpush.msra.mxu0 %v559
      %648 = vmatpush.msra.mxu0 %v555
      %649 = vmatpush.msra.mxu0 %v551
      %650 = vmatpush.msra.mxu0 %v547
      %651 = vmatpush.msra.mxu0 %v543
      %652 = vmatpush.msra.mxu0 %v539
      %653 = vmatpush.msra.mxu0 %v535
      %654 = vmatpush.msra.mxu0 %v531
      %655 = vmatpush.msra.mxu0 %v527
      %656 = vmatpush.msra.mxu0 %v523
      %657 = vmatpush.msra.mxu0 %v519
      %658 = vmatpush.msra.mxu0 %v515
      %659 = vmatpush.msra.mxu0 %v511
      %660 = vmatmul.f32.gmra.mxu0 %v80
      %v661 = vpop.f32.mrf.mxu0
      %v662 = vadd.f32 %v642, %v661
      %663 = vdwg.mxu0
      %664 = vmatpush.msra.mxu0 %v508
      %665 = vmatpush.msra.mxu0 %v504
      %666 = vmatpush.msra.mxu0 %v500
      %667 = vmatpush.msra.mxu0 %v496
      %668 = vmatpush.msra.mxu0 %v492
      %669 = vmatpush.msra.mxu0 %v488
      %670 = vmatpush.msra.mxu0 %v484
      %671 = vmatpush.msra.mxu0 %v480
      %672 = vmatpush.msra.mxu0 %v476
      %673 = vmatpush.msra.mxu0 %v472
      %674 = vmatpush.msra.mxu0 %v468
      %675 = vmatpush.msra.mxu0 %v464
      %676 = vmatpush.msra.mxu0 %v460
      %677 = vmatpush.msra.mxu0 %v456
      %678 = vmatpush.msra.mxu0 %v452
      %679 = vmatpush.msra.mxu0 %v448
      %680 = vmatmul.f32.gmra.mxu0 %v445
      %v681 = vpop.f32.mrf.mxu0
      %v682 = vadd.f32 %v578, %v681
      %683 = vdwg.mxu0
      %684 = vmatpush.msra.mxu0 %v572
      %685 = vmatpush.msra.mxu0 %v568
      %686 = vmatpush.msra.mxu0 %v564
      %687 = vmatpush.msra.mxu0 %v560
      %688 = vmatpush.msra.mxu0 %v556
      %689 = vmatpush.msra.mxu0 %v552
      %690 = vmatpush.msra.mxu0 %v548
      %691 = vmatpush.msra.mxu0 %v544
      %692 = vmatpush.msra.mxu0 %v540
      %693 = vmatpush.msra.mxu0 %v536
      %694 = vmatpush.msra.mxu0 %v532
      %695 = vmatpush.msra.mxu0 %v528
      %696 = vmatpush.msra.mxu0 %v524
      %697 = vmatpush.msra.mxu0 %v520
      %698 = vmatpush.msra.mxu0 %v516
      %699 = vmatpush.msra.mxu0 %v512
      %700 = vmatmul.f32.gmra.mxu0 %v80
      %v701 = vpop.f32.mrf.mxu0
      %v702 = vadd.f32 %v682, %v701
      %703 = vdwg.mxu0
      %704 = vmatpush.msra.mxu0 %v509
      %705 = vmatpush.msra.mxu0 %v505
      %706 = vmatpush.msra.mxu0 %v501
      %707 = vmatpush.msra.mxu0 %v497
      %708 = vmatpush.msra.mxu0 %v493
      %709 = vmatpush.msra.mxu0 %v489
      %710 = vmatpush.msra.mxu0 %v485
      %711 = vmatpush.msra.mxu0 %v481
      %712 = vmatpush.msra.mxu0 %v477
      %713 = vmatpush.msra.mxu0 %v473
      %714 = vmatpush.msra.mxu0 %v469
      %715 = vmatpush.msra.mxu0 %v465
      %716 = vmatpush.msra.mxu0 %v461
      %717 = vmatpush.msra.mxu0 %v457
      %718 = vmatpush.msra.mxu0 %v453
      %719 = vmatpush.msra.mxu0 %v449
      %720 = vmatmul.f32.gmra.mxu0 %v445
      %v721 = vpop.f32.mrf.mxu0
      %v722 = vadd.f32 %v579, %v721
      %723 = vdwg.mxu0
      %724 = vmatpush.msra.mxu0 %v573
      %725 = vmatpush.msra.mxu0 %v569
      %726 = vmatpush.msra.mxu0 %v565
      %727 = vmatpush.msra.mxu0 %v561
      %728 = vmatpush.msra.mxu0 %v557
      %729 = vmatpush.msra.mxu0 %v553
      %730 = vmatpush.msra.mxu0 %v549
      %731 = vmatpush.msra.mxu0 %v545
      %732 = vmatpush.msra.mxu0 %v541
      %733 = vmatpush.msra.mxu0 %v537
      %734 = vmatpush.msra.mxu0 %v533
      %735 = vmatpush.msra.mxu0 %v529
      %736 = vmatpush.msra.mxu0 %v525
      %737 = vmatpush.msra.mxu0 %v521
      %738 = vmatpush.msra.mxu0 %v517
      %739 = vmatpush.msra.mxu0 %v513
      %740 = vmatmul.f32.gmra.mxu0 %v80
      %v741 = vpop.f32.mrf.mxu0
      %v742 = vadd.f32 %v722, %v741
      %743 = vdwg.mxu0
      %v744 = vxor.u32 %v622, 2147483648
      %v745 = vmul.f32 %v744, 1.442695
      %v746 = vpow.pop %v745
      %v747 = vadd.f32 %v746, 1.0
      %v748 = vrcp.pop %v747
      %v749 = vmul.f32 %v747, %v748
      %v750 = vsub.f32 1.0, %v749
      %v751 = vmul.f32 %v748, %v750
      %v752 = vadd.f32 %v748, %v751
      %vm753 = vweird.f32 %v747
      %vm754 = vweird.f32 %v748
      %vm755 = vmor %vm753, %vm754
      %v756 = vsel %vm755, %v748, %v752
      %v757 = vand.u32 2147483647, %v747
      %vm758 = vcmp.eq.f32.partialorder %v757, 8.507059e+37
      %v759 = vand.u32 %v747, 2147483648
      %v760 = vor.u32 1.1754944e-38, %v759
      %v761 = vsel %vm758, %v760, %v756
      %v762 = vmul.f32 1.0, %v761
      %v763 = vxor.u32 %v662, 2147483648
      %v764 = vmul.f32 %v763, 1.442695
      %v765 = vpow.pop %v764
      %v766 = vadd.f32 %v765, 1.0
      %v767 = vrcp.pop %v766
      %v768 = vmul.f32 %v766, %v767
      %v769 = vsub.f32 1.0, %v768
      %v770 = vmul.f32 %v767, %v769
      %v771 = vadd.f32 %v767, %v770
      %vm772 = vweird.f32 %v766
      %vm773 = vweird.f32 %v767
      %vm774 = vmor %vm772, %vm773
      %v775 = vsel %vm774, %v767, %v771
      %v776 = vand.u32 2147483647, %v766
      %vm777 = vcmp.eq.f32.partialorder %v776, 8.507059e+37
      %v778 = vand.u32 %v766, 2147483648
      %v779 = vor.u32 1.1754944e-38, %v778
      %v780 = vsel %vm777, %v779, %v775
      %v781 = vmul.f32 1.0, %v780
      %v782 = vtanh.pop %v702
      %v783 = vxor.u32 %v742, 2147483648
      %v784 = vmul.f32 %v783, 1.442695
      %v785 = vpow.pop %v784
      %v786 = vadd.f32 %v785, 1.0
      %v787 = vrcp.pop %v786
      %v788 = vmul.f32 %v786, %v787
      %v789 = vsub.f32 1.0, %v788
      %v790 = vmul.f32 %v787, %v789
      %v791 = vadd.f32 %v787, %v790
      %vm792 = vweird.f32 %v786
      %vm793 = vweird.f32 %v787
      %vm794 = vmor %vm792, %vm793
      %v795 = vsel %vm794, %v787, %v791
      %v796 = vand.u32 2147483647, %v786
      %vm797 = vcmp.eq.f32.partialorder %v796, 8.507059e+37
      %v798 = vand.u32 %v786, 2147483648
      %v799 = vor.u32 1.1754944e-38, %v798
      %v800 = vsel %vm797, %v799, %v795
      %v801 = vmul.f32 1.0, %v800
      %v802 = vmul.f32 %v781, %v81
      %v803 = vmul.f32 %v762, %v782
      %v804 = vadd.f32 %v802, %v803
      %v805 = vtanh.pop %v804
      %v806 = vmul.f32 %v801, %v805
      %v807 = vstv %s73
      %vm808 = vcmp.lt.s32.totalorder %v807, %v71
      %v809 = vsel %vm808, 1, 0
      %810 = vset.pattern.permute.xlu0 0
      %811 = vperm.xlu0 %810, %v809
      %v812 = vpop.permute.xlu0 %811
      %vm813 = vcmp.eq.s32.totalorder %v812, 1
      %v814 = vsel %vm813, %v806, 0.0
      %s815 = scalar_lea.vmem [#allocation8], %s82
      %816 = vst [vmem:[%s815] sm:$0xf] %v814
    $region42: #{tpu_custom_call.1} parent=1 // loop_footer
      %s77 = sadd.s32 1, %s73
    $region43: #{tpu_custom_call.1} parent=1 // loop_footer_branch
      %72 = sbr.rel target = $region39
    $region44: #{tpu_custom_call.1} parent=1 // loop_exit
      _
    // Predicated region
    $region45: #{tpu_custom_call.1} parent=1 // pred_check
      _
    $region46: #{tpu_custom_call.1} parent=1 // pred_check_branch
      %818 = sbr.rel (0) target = $region48
    $region47: #{tpu_custom_call.1} parent=1 // pred_region
      %820 = vsyncadd [#allocation4], 0
      %s821 = sshll.u32 [#allocation8], 4
      %s822 = int_to_ptr.vmem [resolvable:$true] %s821
      %s823 = sshll.u32 %s6, 4
      %s824 = int_to_ptr.hbm [resolvable:$true] %s823
      %829 = dma.vmem_to_hbm [thread:$0]  %s822, 512, %s824, [#allocation4], 64, 64, 4
    $region48: #{tpu_custom_call.1} parent=1 // pred_fallthru
      _
    // Predicated region
    $region49: #{tpu_custom_call.1} parent=1 // pred_check
      _
    $region50: #{tpu_custom_call.1} parent=1 // pred_check_branch
      %831 = sbr.rel (0) target = $region52
    $region51: #{tpu_custom_call.1} parent=1 // pred_region
      %833 = dma.done [#allocation4], 512
    $region52: #{tpu_custom_call.1} parent=1 // pred_fallthru
      _
    %834 = vsyncpa [#allocation3], 1
    %835 = vsyncpa [#allocation6], 1
    %836 = vsyncpa [#allocation4], 1

</llo_original>
